<compile_context>
chip_gen: v7x
topology: tpu7x:2x2x1
jax: 0.10.0
libtpu: 0.0.40
codegen_flags: <defaults>
</compile_context>

<pallas_src>
import jax
import jax.numpy as jnp
from jax import lax
from jax.experimental import pallas as pl
from jax.experimental.pallas import tpu as pltpu

_LANE = 128


def _round_up(v, m):
    return ((v + m - 1) // m) * m


def _vmem_capacity_bytes():
    try:
        cap = getattr(pltpu.get_tpu_info(), "vmem_capacity_bytes", None)
        if cap:
            return int(cap)
    except Exception:
        pass
    return 64 << 20  # conservative default (v7x per-TensorCore VMEM)


def _choose_tiles(n, fp, adj_bytes, feat_bytes, budget_bytes):
    """Pick (TM, TK, Nr, Nc).

    Accounts for every VMEM-resident buffer of the pipeline:
      adjacency tile (TM, TK) x2 buffers (+ one f32 upcast temp if feat=f32),
      hn tile (TK, Fp) x2, output tile (TM, Fp) x2, accumulator (TM, Fp) x1,
      dinv row tile (TM, 1) x2 (lane-padded to 128).
    """
    nc_full = _round_up(n, _LANE)

    # Contraction tile: keep the whole (padded) column range resident when the
    # double-buffered hn tile fits in ~1/3 of the budget; otherwise pick the
    # largest 128-multiple divisor of Nc that does (K-tiling).
    tk_cap = max(_LANE,
                 ((budget_bytes // 3) // (2 * fp * feat_bytes)) // _LANE * _LANE)
    if nc_full <= tk_cap:
        tk = nc_full
    else:
        tk = _LANE
        t = _LANE
        while t <= tk_cap:
            if nc_full % t == 0:
                tk = t
            t += _LANE
    nc = nc_full

    conv_temp = 4 if (feat_bytes == 4 and adj_bytes < 4) else 0
    per_row = (tk * (2 * adj_bytes + conv_temp)   # adjacency tile (+ upcast temp)
               + 2 * fp * 4 + fp * 4              # output tile + accumulator
               + 2 * _LANE * 4)                   # dinv row tile (lane-padded)
    rem = budget_bytes - 2 * tk * fp * feat_bytes
    tm = (min(max(rem, 0) // per_row, 1024) // _LANE) * _LANE
    tm = max(_LANE, tm)
    tm = min(tm, _round_up(n, _LANE))
    nr = _round_up(n, tm)
    return tm, tk, nr, nc


def _gcn_kernel(dinv_ref, hn_ref, adj_ref, o_ref, acc_ref):
    k = pl.program_id(2)

    @pl.when(k == 0)
    def _init():
        acc_ref[...] = jnp.zeros_like(acc_ref)

    # out_rows += A_rows_cols @ (D^{-1/2} (x W^T + b))_cols ; f32 accumulation.
    acc_ref[...] += jnp.dot(adj_ref[...].astype(hn_ref.dtype), hn_ref[...],
                            preferred_element_type=jnp.float32)

    @pl.when(k == pl.num_programs(2) - 1)
    def _finalize():
        o_ref[...] = (dinv_ref[...] * acc_ref[...]).astype(o_ref.dtype)


def batched_gcn_layer(x, adjacency, weight, bias, *, feature_dtype=jnp.float32):
    """x: (B, N, Fin); adjacency: (B, N, N); weight: (Fout, Fin); bias: (Fout,)."""
    B, N, Fin = x.shape
    Fout = weight.shape[0]
    feat_dt = jnp.dtype(feature_dtype)

    # ---- wrapper-side preprocessing -----------------------------------------
    # 0/1 adjacency is exact in bfloat16; the degree row-sum runs on the bf16
    # copy with f32 accumulation (still one extra B*N^2 read of the adjacency).
    # TODO(synk): accept precomputed degrees / reuse them across layers so the
    # hot path reads the adjacency exactly once.
    adj_bf = adjacency.astype(jnp.bfloat16)
    deg = jnp.sum(adj_bf, axis=-1, dtype=jnp.float32)                 # (B, N)
    dinv = jnp.where(deg > 0.0, lax.rsqrt(jnp.maximum(deg, 1.0)), 0.0)

    # Lane-padded output features; hn = D^{-1/2} (x W^T + b) computed in XLA.
    Fp = max(_LANE, _round_up(Fout, _LANE))
    w_pad = jnp.zeros((Fin, Fp), jnp.float32).at[:, :Fout].set(
        weight.T.astype(jnp.float32))
    b_pad = jnp.zeros((Fp,), jnp.float32).at[:Fout].set(bias.astype(jnp.float32))
    hn = dinv[..., None] * (
        jnp.einsum("bnf,fo->bno", x.astype(jnp.float32), w_pad) + b_pad)
    hn = hn.astype(feat_dt)

    # ---- generation-aware tiling / padding ----------------------------------
    vmem_cap = _vmem_capacity_bytes()
    vmem_limit = int(min(vmem_cap * 3 // 4, 100 << 20))  # ~48 MiB v7x, ~96 MiB v5e/v6e
    budget = vmem_limit * 3 // 4
    TM, TK, Nr, Nc = _choose_tiles(N, Fp, adj_bytes=2,
                                   feat_bytes=feat_dt.itemsize,
                                   budget_bytes=budget)

    adj_p = adj_bf
    if (Nr, Nc) != (N, N):
        adj_p = jnp.zeros((B, Nr, Nc), jnp.bfloat16).at[:, :N, :N].set(adj_bf)
    hn_p = hn
    if Nc != N:
        hn_p = jnp.zeros((B, Nc, Fp), feat_dt).at[:, :N, :].set(hn)
    dinv_p = dinv[..., None]
    if Nr != N:
        dinv_p = jnp.zeros((B, Nr, 1), jnp.float32).at[:, :N, :].set(dinv_p)

    grid = (B, Nr // TM, Nc // TK)

    out = pl.pallas_call(
        _gcn_kernel,
        out_shape=jax.ShapeDtypeStruct((B, Nr, Fp), jnp.float32),
        grid_spec=pltpu.PrefetchScalarGridSpec(
            num_scalar_prefetch=0,
            grid=grid,
            in_specs=[
                # dinv, current row tile (left scaling of the output rows)
                pl.BlockSpec((None, TM, 1), lambda b, i, k: (b, i, 0)),
                # hn: contraction tile (re-fetched only when b or k changes)
                pl.BlockSpec((None, TK, Fp), lambda b, i, k: (b, k, 0)),
                # adjacency: bf16 (row, col) tile
                pl.BlockSpec((None, TM, TK), lambda b, i, k: (b, i, k)),
            ],
            out_specs=pl.BlockSpec((None, TM, Fp), lambda b, i, k: (b, i, 0)),
            scratch_shapes=[pltpu.VMEM((TM, Fp), jnp.float32)],
        ),
        compiler_params=pltpu.CompilerParams(
            dimension_semantics=("parallel", "parallel", "arbitrary"),
            vmem_limit_bytes=vmem_limit,
        ),
    )(dinv_p, hn_p, adj_p)

    # NOTE: this slice is one small (B, N, Fout) copy; downstream Pallas
    # consumers can take the lane-padded (B, Nr, Fp) output directly instead.
    if (Nr, Fp) != (N, Fout):
        out = out[:, :N, :Fout]
    return out


def _reference(x, adjacency, weight, bias):
    deg = adjacency.sum(axis=-1)                               # (B, N)
    dinv = jnp.where(deg == 0, 0.0, deg ** -0.5)[..., None]    # (B, N, 1)
    adj_norm = adjacency * dinv * jnp.swapaxes(dinv, 1, 2)
    h = jnp.einsum("bnf,of->bno", x, weight) + bias
    return jnp.einsum("bnm,bmo->bno", adj_norm, h)


if __name__ == "__main__":
    key = jax.random.PRNGKey(0)
    k_x, k_adj, k_w, k_b = jax.random.split(key, 4)

    B, N, Fin, Fout = 2, 16, 32, 16

    x = jax.random.normal(k_x, (B, N, Fin), dtype=jnp.float32)
    # binary adjacency (some rows may be all-zero -> exercises the deg==0 path)
    adjacency = (jax.random.uniform(k_adj, (B, N, N)) < 0.3).astype(jnp.float32)

    # deterministic parameter init (shapes from nn.Linear(in_features, out_features))
    bound = 1.0 / (Fin ** 0.5)
    weight = jax.random.uniform(k_w, (Fout, Fin), minval=-bound, maxval=bound,
                                dtype=jnp.float32)
    bias = jax.random.uniform(k_b, (Fout,), minval=-bound, maxval=bound,
                              dtype=jnp.float32)

    out = jax.block_until_ready(batched_gcn_layer(x, adjacency, weight, bias))
    ref = jax.block_until_ready(_reference(x, adjacency, weight, bias))

    assert out.shape == (B, N, Fout)
    assert jnp.allclose(out, ref, atol=1e-5, rtol=1e-5), float(
        jnp.max(jnp.abs(out - ref)))

    print("KERNEL_OK")
</pallas_src>

<mosaic_0001>
module attributes {stable_mosaic.version = 11 : i64} {
  func.func @_gcn_kernel(%arg0: i32, %arg1: i32, %arg2: i32, %arg3: memref<1x128x1xf32, #tpu.memory_space<vmem>>, %arg4: memref<1x128x128xf32, #tpu.memory_space<vmem>>, %arg5: memref<1x128x128xbf16, #tpu.memory_space<vmem>>, %arg6: memref<1x128x128xf32, #tpu.memory_space<vmem>>, %arg7: memref<128x128xf32, #tpu.memory_space<vmem>>) attributes {dimension_semantics = [#tpu.dimension_semantics<parallel>, #tpu.dimension_semantics<parallel>, #tpu.dimension_semantics<arbitrary>], iteration_bounds = array<i64: 2, 1, 1>, scalar_prefetch = 0 : i64, scratch_operands = 1 : i64, tpu.core_type = #tpu.core_type<tc>, window_params = [{transform_indices = @transform_0, window_bounds = array<i64: 1, 128, 1>}, {transform_indices = @transform_1, window_bounds = array<i64: 1, 128, 128>}, {transform_indices = @transform_2, window_bounds = array<i64: 1, 128, 128>}, {transform_indices = @transform_3, window_bounds = array<i64: 1, 128, 128>}]} {
    %c0_i32 = arith.constant 0 : i32
    %0 = arith.cmpi eq, %arg2, %c0_i32 : i32
    %1 = arith.extui %0 : i1 to i32
    %c0_i32_0 = arith.constant 0 : i32
    %2 = arith.cmpi ne, %1, %c0_i32_0 : i32
    scf.if %2 {
      %cst_12 = arith.constant 0.000000e+00 : f32
      %15 = vector.broadcast %cst_12 : f32 to vector<128x128xf32>
      %c0_13 = arith.constant 0 : index
      %c0_14 = arith.constant 0 : index
      %16 = vector.load %arg7[%c0_13, %c0_14] : memref<128x128xf32, #tpu.memory_space<vmem>>, vector<128x128xf32>
      tpu.vector_store %arg7[%c0_13, %c0_14], %15 {strides = array<i32>} : memref<128x128xf32, #tpu.memory_space<vmem>>, vector<128x128xf32>,
    } else {
    }
    %c0 = arith.constant 0 : index
    %c0_1 = arith.constant 0 : index
    %3 = vector.load %arg7[%c0, %c0_1] : memref<128x128xf32, #tpu.memory_space<vmem>>, vector<128x128xf32>
    %c0_2 = arith.constant 0 : index
    %c0_3 = arith.constant 0 : index
    %c0_4 = arith.constant 0 : index
    %4 = vector.load %arg5[%c0_2, %c0_3, %c0_4] : memref<1x128x128xbf16, #tpu.memory_space<vmem>>, vector<1x128x128xbf16>
    %5 = vector.shape_cast %4 : vector<1x128x128xbf16> to vector<128x128xbf16>
    %6 = arith.extf %5 : vector<128x128xbf16> to vector<128x128xf32>
    %c0_5 = arith.constant 0 : index
    %c0_6 = arith.constant 0 : index
    %c0_7 = arith.constant 0 : index
    %7 = vector.load %arg4[%c0_5, %c0_6, %c0_7] : memref<1x128x128xf32, #tpu.memory_space<vmem>>, vector<1x128x128xf32>
    %8 = vector.shape_cast %7 : vector<1x128x128xf32> to vector<128x128xf32>
    %cst = arith.constant dense<0.000000e+00> : vector<128x128xf32>
    %9 = tpu.matmul %6, %8, %cst {dimension_numbers = #tpu.dot_dimension_numbers<[1], [0], [0], [1], [0, 0, 1, 1], [], []>} : vector<128x128xf32>, vector<128x128xf32>, vector<128x128xf32> -> vector<128x128xf32>
    %10 = arith.addf %3, %9 : vector<128x128xf32>
    %c0_8 = arith.constant 0 : index
    %c0_9 = arith.constant 0 : index
    %11 = vector.load %arg7[%c0_8, %c0_9] : memref<128x128xf32, #tpu.memory_space<vmem>>, vector<128x128xf32>
    tpu.vector_store %arg7[%c0_8, %c0_9], %10 {strides = array<i32>} : memref<128x128xf32, #tpu.memory_space<vmem>>, vector<128x128xf32>,
    %c0_i32_10 = arith.constant 0 : i32
    %12 = arith.cmpi eq, %arg2, %c0_i32_10 : i32
    %13 = arith.extui %12 : i1 to i32
    %c0_i32_11 = arith.constant 0 : i32
    %14 = arith.cmpi ne, %13, %c0_i32_11 : i32
    scf.if %14 {
      %c0_12 = arith.constant 0 : index
      %c0_13 = arith.constant 0 : index
      %c0_14 = arith.constant 0 : index
      %15 = vector.load %arg3[%c0_12, %c0_13, %c0_14] : memref<1x128x1xf32, #tpu.memory_space<vmem>>, vector<1x128x1xf32>
      %16 = vector.shape_cast %15 : vector<1x128x1xf32> to vector<128x1xf32>
      %c0_15 = arith.constant 0 : index
      %c0_16 = arith.constant 0 : index
      %17 = vector.load %arg7[%c0_15, %c0_16] : memref<128x128xf32, #tpu.memory_space<vmem>>, vector<128x128xf32>
      %18 = vector.broadcast %16 : vector<128x1xf32> to vector<128x128xf32>
      %19 = arith.mulf %18, %17 : vector<128x128xf32>
      %c0_17 = arith.constant 0 : index
      %c0_18 = arith.constant 0 : index
      %c0_19 = arith.constant 0 : index
      %20 = vector.load %arg6[%c0_17, %c0_18, %c0_19] : memref<1x128x128xf32, #tpu.memory_space<vmem>>, vector<1x128x128xf32>
      %21 = vector.shape_cast %20 : vector<1x128x128xf32> to vector<128x128xf32>
      %22 = vector.shape_cast %19 : vector<128x128xf32> to vector<1x128x128xf32>
      tpu.vector_store %arg6[%c0_17, %c0_18, %c0_19], %22 {strides = array<i32>} : memref<1x128x128xf32, #tpu.memory_space<vmem>>, vector<1x128x128xf32>,
    } else {
    }
    return
  }
  func.func @transform_0(%arg0: i32, %arg1: i32, %arg2: i32) -> (i32, i32, i32) {
    %c0_i32 = arith.constant 0 : i32
    %c0_i32_0 = arith.constant 0 : i32
    return %arg0, %arg1, %c0_i32 : i32, i32, i32
  }
  func.func @transform_1(%arg0: i32, %arg1: i32, %arg2: i32) -> (i32, i32, i32) {
    %c0_i32 = arith.constant 0 : i32
    %c0_i32_0 = arith.constant 0 : i32
    return %arg0, %arg2, %c0_i32 : i32, i32, i32
  }
  func.func @transform_2(%arg0: i32, %arg1: i32, %arg2: i32) -> (i32, i32, i32) {
    %c0_i32 = arith.constant 0 : i32
    return %arg0, %arg1, %arg2 : i32, i32, i32
  }
  func.func @transform_3(%arg0: i32, %arg1: i32, %arg2: i32) -> (i32, i32, i32) {
    %c0_i32 = arith.constant 0 : i32
    %c0_i32_0 = arith.constant 0 : i32
    return %arg0, %arg1, %c0_i32 : i32, i32, i32
  }
}

</mosaic_0001>

<llo_original>
// kernel: tpu_custom_call.1
$region0: #{tpu_custom_call.1}
  #allocation0 [shape = 'u32[]', space=smem, size = 0x4, offset = 0x4, fixed_abs, tag = 'smem constant byte address 0x4 - core index']
  #allocation1 [shape = 'u32[144,128]{1,0:T(1,128)}', space=vmem, size = 0x12000, scoped, tag = 'internal scratch']
  #allocation2 [shape = 'f32[128,128]{1,0:T(8,128)}', space=vmem, size = 0x10000, scoped, tag = 'scratch operand']
  %s0 = inlined_call_operand.vmem [shape: f32[2,128,1], index: 0, kind: input, shape index: {}]
  %s1 = inlined_call_operand.vmem [shape: f32[2,128,128], index: 1, kind: input, shape index: {}]
  %s2 = inlined_call_operand.hbm [shape: bf16[2,128,128], index: 2, kind: input, shape index: {}]
  %s3 = inlined_call_operand.hbm [shape: f32[2,128,128], index: 3, kind: output, shape index: {}]
  %s4 = sld [smem:[#allocation0]]
  $region57: #{tpu_custom_call.1} parent=0
    _
  %s6 = ssub.s32 1, %s4
  %s7 = scalar_select 0, %s6, %s4
  $region1: #{tpu_custom_call.1} parent=0
    #allocation3 [shape = 'u8[65536]{0}', space=vmem, size = 0x10000, scoped, tag = 'input window, operand 2']
    #allocation4 [shape = 's32[2]{0}', space=sflag, size = 0x8, scoped, tag = 'scoped memory for tpu_custom_call.1']
    #allocation5 [shape = 's32[2]{0}', space=sflag, size = 0x8, scoped, tag = 'scoped memory for tpu_custom_call.1']
    #allocation6 [shape = 'u8[131072]{0}', space=vmem, size = 0x20000, scoped, tag = 'output window, operand 0']
    %8 = vsyncpa [#allocation4], 0
    %s9 = scalar_lea.sflag [#allocation4], 1
    %10 = vsyncpa %s9, 0
    %11 = vsyncpa [#allocation5], 0
    %s12 = scalar_lea.sflag [#allocation5], 1
    %13 = vsyncpa %s12, 0
    loop: start=0, step=1, limit=4
    $region2: #{tpu_custom_call.1} parent=1 // loop_pre_header
      _
    $region3: #{tpu_custom_call.1} parent=1 // loop_header
      %s15 = sphi 0, %s19
      %p16 = scmp.ge.s32.totalorder %s15, 4
      %s22 = sphi 0, %s41
      %s23 = sphi 0, %s37
      %s24 = sphi 0, %s33
      %s25 = sphi 0, %s22
      %s26 = sphi 0, %s23
      %s27 = sphi 0, %s24
      %s28 = sphi 0, %s25
      %s29 = sphi 0, %s26
      %s30 = sphi 0, %s27
      %s46 = sphi 0, %s48
      %s49 = sphi 0, %s46
      %s50 = sphi 0, %s49
      %s66 = sphi 0, %s50
      %s74 = sphi 0, %s76
      %s77 = sphi 0, %s74
      %s78 = sphi 0, %s77
      %s94 = sphi 0, %s78
      %s104 = sphi 0, %s106
      %s107 = sphi 0, %s104
      %s108 = sphi 0, %s107
      %s124 = sphi 0, %s108
      %s132 = sphi 0, %s134
      %s135 = sphi 0, %s132
      %s136 = sphi 0, %s135
      %s152 = sphi 0, %s136
    $region4: #{tpu_custom_call.1} parent=1 // loop_header_branch
      %18 = sbr.rel (%p16) target = $region8
    $region5: #{tpu_custom_call.1} parent=1 // loop_body
      %s20 = ssub.s32 %s15, 1
      %s21 = ssub.s32 %s15, 2
      %s31 = sadd.s32 1, %s24
      %p32 = scmp.ge.s32.totalorder %s31, 1
      %s33 = scalar_select %p32, 0, %s31
      %s34 = sadd.s32 1, %s23
      %s35 = scalar_select %p32, %s34, %s23
      %p36 = scmp.ge.s32.totalorder %s35, 1
      %s37 = scalar_select %p36, 0, %s35
      %s38 = sadd.s32 1, %s22
      %s39 = scalar_select %p36, %s38, %s22
      %p40 = scmp.ge.s32.totalorder %s39, 2
      %s41 = scalar_select %p40, 0, %s39
      %s42 = ssub.s32 %s22, %s41
      %s43 = ssub.s32 %s23, %s37
      %s44 = sor.u32 %s42, %s43
      %p45 = scmp.eq.s32.totalorder %s44, 0
      %s47 = sadd.s32 %s46, 1
      %s48 = scalar_select %p45, %s46, %s47
      %p51 = pneg %p45
      %p52 = scmp.eq.s32.totalorder %s15, 1
      %p53 = por %p51, %p52
      %p54 = scmp.ne.s32.totalorder %s46, %s49
      %p55 = scmp.eq.s32.totalorder %s15, 0
      %p56 = por %p54, %p55
      %p57 = scmp.ne.s32.totalorder %s46, %s49
      %p58 = scmp.eq.s32.totalorder %s20, 1
      %p59 = por %p57, %p58
      %p60 = scmp.ne.s32.totalorder %s49, %s50
      %p61 = scmp.eq.s32.totalorder %s20, 0
      %p62 = por %p60, %p61
      %p63 = scmp.ne.s32.totalorder %s49, %s50
      %p64 = scmp.eq.s32.totalorder %s21, 1
      %p65 = por %p63, %p64
      %p67 = scmp.ne.s32.totalorder %s50, %s66
      %p68 = scmp.eq.s32.totalorder %s21, 0
      %p69 = por %p67, %p68
      %s70 = ssub.s32 %s22, %s41
      %s71 = ssub.s32 %s24, %s33
      %s72 = sor.u32 %s70, %s71
      %p73 = scmp.eq.s32.totalorder %s72, 0
      %s75 = sadd.s32 %s74, 1
      %s76 = scalar_select %p73, %s74, %s75
      %p79 = pneg %p73
      %p80 = scmp.eq.s32.totalorder %s15, 1
      %p81 = por %p79, %p80
      %p82 = scmp.ne.s32.totalorder %s74, %s77
      %p83 = scmp.eq.s32.totalorder %s15, 0
      %p84 = por %p82, %p83
      %p85 = scmp.ne.s32.totalorder %s74, %s77
      %p86 = scmp.eq.s32.totalorder %s20, 1
      %p87 = por %p85, %p86
      %p88 = scmp.ne.s32.totalorder %s77, %s78
      %p89 = scmp.eq.s32.totalorder %s20, 0
      %p90 = por %p88, %p89
      %p91 = scmp.ne.s32.totalorder %s77, %s78
      %p92 = scmp.eq.s32.totalorder %s21, 1
      %p93 = por %p91, %p92
      %p95 = scmp.ne.s32.totalorder %s78, %s94
      %p96 = scmp.eq.s32.totalorder %s21, 0
      %p97 = por %p95, %p96
      %s98 = ssub.s32 %s22, %s41
      %s99 = ssub.s32 %s23, %s37
      %s100 = sor.u32 %s98, %s99
      %s101 = ssub.s32 %s24, %s33
      %s102 = sor.u32 %s100, %s101
      %p103 = scmp.eq.s32.totalorder %s102, 0
      %s105 = sadd.s32 %s104, 1
      %s106 = scalar_select %p103, %s104, %s105
      %p109 = pneg %p103
      %p110 = scmp.eq.s32.totalorder %s15, 1
      %p111 = por %p109, %p110
      %p112 = scmp.ne.s32.totalorder %s104, %s107
      %p113 = scmp.eq.s32.totalorder %s15, 0
      %p114 = por %p112, %p113
      %p115 = scmp.ne.s32.totalorder %s104, %s107
      %p116 = scmp.eq.s32.totalorder %s20, 1
      %p117 = por %p115, %p116
      %p118 = scmp.ne.s32.totalorder %s107, %s108
      %p119 = scmp.eq.s32.totalorder %s20, 0
      %p120 = por %p118, %p119
      %p121 = scmp.ne.s32.totalorder %s107, %s108
      %p122 = scmp.eq.s32.totalorder %s21, 1
      %p123 = por %p121, %p122
      %p125 = scmp.ne.s32.totalorder %s108, %s124
      %p126 = scmp.eq.s32.totalorder %s21, 0
      %p127 = por %p125, %p126
      %s128 = ssub.s32 %s22, %s41
      %s129 = ssub.s32 %s23, %s37
      %s130 = sor.u32 %s128, %s129
      %p131 = scmp.eq.s32.totalorder %s130, 0
      %s133 = sadd.s32 %s132, 1
      %s134 = scalar_select %p131, %s132, %s133
      %p137 = pneg %p131
      %p138 = scmp.eq.s32.totalorder %s15, 1
      %p139 = por %p137, %p138
      %p140 = scmp.ne.s32.totalorder %s132, %s135
      %p141 = scmp.eq.s32.totalorder %s15, 0
      %p142 = por %p140, %p141
      %p143 = scmp.ne.s32.totalorder %s132, %s135
      %p144 = scmp.eq.s32.totalorder %s20, 1
      %p145 = por %p143, %p144
      %p146 = scmp.ne.s32.totalorder %s135, %s136
      %p147 = scmp.eq.s32.totalorder %s20, 0
      %p148 = por %p146, %p147
      %p149 = scmp.ne.s32.totalorder %s135, %s136
      %p150 = scmp.eq.s32.totalorder %s21, 1
      %p151 = por %p149, %p150
      %p153 = scmp.ne.s32.totalorder %s136, %s152
      %p154 = scmp.eq.s32.totalorder %s21, 0
      %p155 = por %p153, %p154
      %p156 = scmp.le.s32.totalorder 1, %s15
      %p157 = scmp.lt.s32.totalorder %s15, 3
      %p158 = pnand %p156, %p157
      %p159 = pneg %p158
      // Predicated region
      $region9: #{tpu_custom_call.1} parent=5 // pred_check
        _
      $region10: #{tpu_custom_call.1} parent=5 // pred_check_branch
        %161 = sbr.rel (%p158) target = $region12
      $region11: #{tpu_custom_call.1} parent=5 // pred_region
        %s162 = ssub.s32 %s15, 1
      $region12: #{tpu_custom_call.1} parent=5 // pred_fallthru
        _
      %p163 = scmp.lt.s32.totalorder %s15, 2
      // Predicated region
      $region13: #{tpu_custom_call.1} parent=5 // pred_check
        %p164 = pneg %p163
      $region14: #{tpu_custom_call.1} parent=5 // pred_check_branch
        %166 = sbr.rel (%p164) target = $region16
      $region15: #{tpu_custom_call.1} parent=5 // pred_region
        // Predicated region
        $region17: #{tpu_custom_call.1} parent=15 // pred_check
          %p167 = pneg %p56
        $region18: #{tpu_custom_call.1} parent=15 // pred_check_branch
          %169 = sbr.rel (%p167) target = $region20
        $region19: #{tpu_custom_call.1} parent=15 // pred_region
          %s170 = smul.u32 16, %s23
          %p171 = scmp.lt.s32.totalorder %s22, 1
          %s172 = scalar_select %p171, %s22, 1
          %p173 = scmp.lt.s32.totalorder %s170, 15
          %s174 = scalar_select %p173, %s170, 15
          %s175 = smul.addr %s172, 16
          %s176 = sadd.s32 %s174, %s175
          %s177 = smul.addr %s176, 8
          %s178 = scalar_lea.vmem %s0, %s177
          %s179 = smul.u32 16, %s23
        $region20: #{tpu_custom_call.1} parent=15 // pred_fallthru
          _
        // Predicated region
        $region21: #{tpu_custom_call.1} parent=15 // pred_check
          %p180 = pneg %p84
        $region22: #{tpu_custom_call.1} parent=15 // pred_check_branch
          %182 = sbr.rel (%p180) target = $region24
        $region23: #{tpu_custom_call.1} parent=15 // pred_region
          %s183 = smul.u32 16, %s24
          %p184 = scmp.lt.s32.totalorder %s22, 1
          %s185 = scalar_select %p184, %s22, 1
          %p186 = scmp.lt.s32.totalorder %s183, 15
          %s187 = scalar_select %p186, %s183, 15
          %s188 = smul.addr %s185, 16
          %s189 = sadd.s32 %s187, %s188
          %s190 = smul.addr %s189, 8
          %s191 = scalar_lea.vmem %s1, %s190
          %s192 = smul.u32 16, %s24
        $region24: #{tpu_custom_call.1} parent=15 // pred_fallthru
          _
        // Predicated region
        $region25: #{tpu_custom_call.1} parent=15 // pred_check
          %p193 = pneg %p114
        $region26: #{tpu_custom_call.1} parent=15 // pred_check_branch
          %195 = sbr.rel (%p193) target = $region28
        $region27: #{tpu_custom_call.1} parent=15 // pred_region
          %s196 = sand.u32 %s104, 1
          %s197 = scalar_lea.sflag [#allocation4], %s196
          %s198 = sand.u32 %s104, 1
          %s199 = smul.addr %s198, 64
          %s200 = scalar_lea.vmem [#allocation3], %s199
          %s201 = smul.u32 16, %s23
          %s203 = ssub.s32 1024, 1024
          %204 = vsyncadd %s197, %s203
          %s205 = sadd.s32 %s24, %s201
          %s206 = smul.addr %s22, 16
          %s207 = sadd.s32 %s205, %s206
          %s208 = smul.addr %s207, 64
          %s209 = scalar_lea.hbm %s2, %s208
          %s210 = sshll.u32 %s200, 4
          %s211 = int_to_ptr.vmem [resolvable:$true] %s210
          %216 = dma.hbm_to_vmem [thread:$0]  %s209, 1024, %s211, %s197, 64, 64, 4
        $region28: #{tpu_custom_call.1} parent=15 // pred_fallthru
          _
      $region16: #{tpu_custom_call.1} parent=5 // pred_fallthru
        _
      %p217 = scmp.le.s32.totalorder 1, %s15
      %p218 = scmp.lt.s32.totalorder %s15, 3
      %p219 = pnand %p217, %p218
      %p220 = pneg %p219
      // Predicated region
      $region29: #{tpu_custom_call.1} parent=5 // pred_check
        _
      $region30: #{tpu_custom_call.1} parent=5 // pred_check_branch
        %222 = sbr.rel (%p219) target = $region32
      $region31: #{tpu_custom_call.1} parent=5 // pred_region
        %s223 = ssub.s32 %s15, 1
        %s224 = sand.u32 %s107, 1
        %s225 = scalar_lea.sflag [#allocation4], %s224
        %s226 = sand.u32 %s107, 1
        %s227 = smul.addr %s226, 64
        %s228 = scalar_lea.vmem [#allocation3], %s227
        // Predicated region
        $region33: #{tpu_custom_call.1} parent=31 // pred_check
          %p229 = pneg %p120
        $region34: #{tpu_custom_call.1} parent=31 // pred_check_branch
          %231 = sbr.rel (%p229) target = $region36
        $region35: #{tpu_custom_call.1} parent=31 // pred_region
          %232 = dma.done %s225, 1024
        $region36: #{tpu_custom_call.1} parent=31 // pred_fallthru
          _
        %s233 = smul.u32 16, %s26
        %p234 = scmp.lt.s32.totalorder %s25, 1
        %s235 = scalar_select %p234, %s25, 1
        %p236 = scmp.lt.s32.totalorder %s233, 15
        %s237 = scalar_select %p236, %s233, 15
        %s238 = smul.addr %s235, 16
        %s239 = sadd.s32 %s237, %s238
        %s240 = smul.addr %s239, 8
        %s241 = scalar_lea.vmem %s0, %s240
        %p242 = pneg %p62
        %p243 = pneg %p59
        %s244 = smul.u32 16, %s27
        %p245 = scmp.lt.s32.totalorder %s25, 1
        %s246 = scalar_select %p245, %s25, 1
        %p247 = scmp.lt.s32.totalorder %s244, 15
        %s248 = scalar_select %p247, %s244, 15
        %s249 = smul.addr %s246, 16
        %s250 = sadd.s32 %s248, %s249
        %s251 = smul.addr %s250, 8
        %s252 = scalar_lea.vmem %s1, %s251
        %p253 = pneg %p90
        %p254 = pneg %p87
        %s255 = sand.u32 %s107, 1
        %s256 = scalar_lea.sflag [#allocation4], %s255
        %s257 = sand.u32 %s107, 1
        %s258 = smul.addr %s257, 64
        %s259 = scalar_lea.vmem [#allocation3], %s258
        %p260 = pneg %p120
        %p261 = pneg %p117
        %p262 = pneg %p148
        %p263 = pneg %p145
        %s264 = sand.u32 %s135, 1
        %s265 = scalar_lea.sflag [#allocation5], %s264
        %s266 = sand.u32 %s135, 1
        %s267 = smul.addr %s266, 128
        %s268 = scalar_lea.vmem [#allocation6], %s267
        %s269 = smul.u32 16, %s26
        %p270 = scmp.lt.s32.totalorder %s25, 1
        %s271 = scalar_select %p270, %s25, 1
        %p272 = scmp.lt.s32.totalorder %s269, 15
        %s273 = scalar_select %p272, %s269, 15
        %s274 = smul.addr %s271, 16
        %s275 = sadd.s32 %s273, %s274
        %s276 = smul.addr %s275, 8
        %s277 = scalar_lea.vmem %s0, %s276
        %s278 = smul.u32 16, %s26
        %s279 = smul.u32 16, %s27
        %p280 = scmp.lt.s32.totalorder %s25, 1
        %s281 = scalar_select %p280, %s25, 1
        %p282 = scmp.lt.s32.totalorder %s279, 15
        %s283 = scalar_select %p282, %s279, 15
        %s284 = smul.addr %s281, 16
        %s285 = sadd.s32 %s283, %s284
        %s286 = smul.addr %s285, 8
        %s287 = scalar_lea.vmem %s1, %s286
        %s288 = smul.u32 16, %s27
        %s289 = smul.u32 16, %s26
        %s290 = smul.u32 16, %s26
        %p291 = scmp.eq.s32.totalorder %s27, 0
        // Predicated region
        $region37: #{tpu_custom_call.1} parent=31 // pred_check
          %p292 = pneg %p291
        $region38: #{tpu_custom_call.1} parent=31 // pred_check_branch
          %294 = sbr.rel (%p292) target = $region40
        $region39: #{tpu_custom_call.1} parent=31 // pred_region
          %295 = vst [vmem:[#allocation2] sm:$0xff] 0.0
          %296 = vst [vmem:[#allocation2 + $0x8] sm:$0xff] 0.0
          %297 = vst [vmem:[#allocation2 + $0x10] sm:$0xff] 0.0
          %298 = vst [vmem:[#allocation2 + $0x18] sm:$0xff] 0.0
          %299 = vst [vmem:[#allocation2 + $0x20] sm:$0xff] 0.0
          %300 = vst [vmem:[#allocation2 + $0x28] sm:$0xff] 0.0
          %301 = vst [vmem:[#allocation2 + $0x30] sm:$0xff] 0.0
          %302 = vst [vmem:[#allocation2 + $0x38] sm:$0xff] 0.0
          %303 = vst [vmem:[#allocation2 + $0x40] sm:$0xff] 0.0
          %304 = vst [vmem:[#allocation2 + $0x48] sm:$0xff] 0.0
          %305 = vst [vmem:[#allocation2 + $0x50] sm:$0xff] 0.0
          %306 = vst [vmem:[#allocation2 + $0x58] sm:$0xff] 0.0
          %307 = vst [vmem:[#allocation2 + $0x60] sm:$0xff] 0.0
          %308 = vst [vmem:[#allocation2 + $0x68] sm:$0xff] 0.0
          %309 = vst [vmem:[#allocation2 + $0x70] sm:$0xff] 0.0
          %310 = vst [vmem:[#allocation2 + $0x78] sm:$0xff] 0.0
        $region40: #{tpu_custom_call.1} parent=31 // pred_fallthru
          _
        %v311 = vld [vmem:[#allocation2] sm:$0xff]
        %v312 = vld [vmem:[#allocation2 + $0x8] sm:$0xff]
        %v313 = vld [vmem:[#allocation2 + $0x10] sm:$0xff]
        %v314 = vld [vmem:[#allocation2 + $0x18] sm:$0xff]
        %v315 = vld [vmem:[#allocation2 + $0x20] sm:$0xff]
        %v316 = vld [vmem:[#allocation2 + $0x28] sm:$0xff]
        %v317 = vld [vmem:[#allocation2 + $0x30] sm:$0xff]
        %v318 = vld [vmem:[#allocation2 + $0x38] sm:$0xff]
        %v319 = vld [vmem:[#allocation2 + $0x40] sm:$0xff]
        %v320 = vld [vmem:[#allocation2 + $0x48] sm:$0xff]
        %v321 = vld [vmem:[#allocation2 + $0x50] sm:$0xff]
        %v322 = vld [vmem:[#allocation2 + $0x58] sm:$0xff]
        %v323 = vld [vmem:[#allocation2 + $0x60] sm:$0xff]
        %v324 = vld [vmem:[#allocation2 + $0x68] sm:$0xff]
        %v325 = vld [vmem:[#allocation2 + $0x70] sm:$0xff]
        %v326 = vld [vmem:[#allocation2 + $0x78] sm:$0xff]
        %v327 = vld [vmem:[%s228] sm:$0xf]
        %v328 = vld [vmem:[%s228 + $0x4] sm:$0xf]
        %v329 = vld [vmem:[%s228 + $0x8] sm:$0xf]
        %v330 = vld [vmem:[%s228 + $0xc] sm:$0xf]
        %v331 = vld [vmem:[%s228 + $0x10] sm:$0xf]
        %v332 = vld [vmem:[%s228 + $0x14] sm:$0xf]
        %v333 = vld [vmem:[%s228 + $0x18] sm:$0xf]
        %v334 = vld [vmem:[%s228 + $0x1c] sm:$0xf]
        %v335 = vld [vmem:[%s228 + $0x20] sm:$0xf]
        %v336 = vld [vmem:[%s228 + $0x24] sm:$0xf]
        %v337 = vld [vmem:[%s228 + $0x28] sm:$0xf]
        %v338 = vld [vmem:[%s228 + $0x2c] sm:$0xf]
        %v339 = vld [vmem:[%s228 + $0x30] sm:$0xf]
        %v340 = vld [vmem:[%s228 + $0x34] sm:$0xf]
        %v341 = vld [vmem:[%s228 + $0x38] sm:$0xf]
        %v342 = vld [vmem:[%s228 + $0x3c] sm:$0xf]
        %v343 = vunpack.c.l.bf16 %v327
        %v344 = vunpack.c.l.bf16 %v328
        %v345 = vunpack.c.l.bf16 %v329
        %v346 = vunpack.c.l.bf16 %v330
        %v347 = vunpack.c.l.bf16 %v331
        %v348 = vunpack.c.l.bf16 %v332
        %v349 = vunpack.c.l.bf16 %v333
        %v350 = vunpack.c.l.bf16 %v334
        %v351 = vunpack.c.l.bf16 %v335
        %v352 = vunpack.c.l.bf16 %v336
        %v353 = vunpack.c.l.bf16 %v337
        %v354 = vunpack.c.l.bf16 %v338
        %v355 = vunpack.c.l.bf16 %v339
        %v356 = vunpack.c.l.bf16 %v340
        %v357 = vunpack.c.l.bf16 %v341
        %v358 = vunpack.c.l.bf16 %v342
        %v359 = vld [vmem:[%s287] sm:$0xff]
        %v360 = vld [vmem:[%s287 + $0x8] sm:$0xff]
        %v361 = vld [vmem:[%s287 + $0x10] sm:$0xff]
        %v362 = vld [vmem:[%s287 + $0x18] sm:$0xff]
        %v363 = vld [vmem:[%s287 + $0x20] sm:$0xff]
        %v364 = vld [vmem:[%s287 + $0x28] sm:$0xff]
        %v365 = vld [vmem:[%s287 + $0x30] sm:$0xff]
        %v366 = vld [vmem:[%s287 + $0x38] sm:$0xff]
        %v367 = vld [vmem:[%s287 + $0x40] sm:$0xff]
        %v368 = vld [vmem:[%s287 + $0x48] sm:$0xff]
        %v369 = vld [vmem:[%s287 + $0x50] sm:$0xff]
        %v370 = vld [vmem:[%s287 + $0x58] sm:$0xff]
        %v371 = vld [vmem:[%s287 + $0x60] sm:$0xff]
        %v372 = vld [vmem:[%s287 + $0x68] sm:$0xff]
        %v373 = vld [vmem:[%s287 + $0x70] sm:$0xff]
        %v374 = vld [vmem:[%s287 + $0x78] sm:$0xff]
        %375 = vmatprep.subr.mxu0 0.0
        %376 = vmatpush1.msra.mxu0 %v359
        %377 = vmatprep.subr.mxu0 0.0
        %378 = vmatpush1.msra.mxu0 %v360
        %379 = vmatprep.subr.mxu0 0.0
        %380 = vmatpush1.msra.mxu0 %v361
        %381 = vmatprep.subr.mxu0 0.0
        %382 = vmatpush1.msra.mxu0 %v362
        %383 = vmatprep.subr.mxu0 0.0
        %384 = vmatpush1.msra.mxu0 %v363
        %385 = vmatprep.subr.mxu0 0.0
        %386 = vmatpush1.msra.mxu0 %v364
        %387 = vmatprep.subr.mxu0 0.0
        %388 = vmatpush1.msra.mxu0 %v365
        %389 = vmatprep.subr.mxu0 0.0
        %390 = vmatpush1.msra.mxu0 %v366
        %391 = vmatprep.subr.mxu0 0.0
        %392 = vmatpush1.msra.mxu0 %v367
        %393 = vmatprep.subr.mxu0 0.0
        %394 = vmatpush1.msra.mxu0 %v368
        %395 = vmatprep.subr.mxu0 0.0
        %396 = vmatpush1.msra.mxu0 %v369
        %397 = vmatprep.subr.mxu0 0.0
        %398 = vmatpush1.msra.mxu0 %v370
        %399 = vmatprep.subr.mxu0 0.0
        %400 = vmatpush1.msra.mxu0 %v371
        %401 = vmatprep.subr.mxu0 0.0
        %402 = vmatpush1.msra.mxu0 %v372
        %403 = vmatprep.subr.mxu0 0.0
        %404 = vmatpush1.msra.mxu0 %v373
        %405 = vmatprep.subr.mxu0 0.0
        %406 = vmatpush1.msra.mxu0 %v374
        %407 = vmatprep.subr.mxu0 0.0
        %408 = vmatpush1.msra.mxu0 0.0
        %409 = vmatprep.subr.mxu0 0.0
        %410 = vmatpush1.msra.mxu0 0.0
        %411 = vmatprep.subr.mxu0 0.0
        %412 = vmatpush1.msra.mxu0 0.0
        %413 = vmatprep.subr.mxu0 0.0
        %414 = vmatpush1.msra.mxu0 0.0
        %415 = vmatprep.subr.mxu0 0.0
        %416 = vmatpush1.msra.mxu0 0.0
        %417 = vmatprep.subr.mxu0 0.0
        %418 = vmatpush1.msra.mxu0 0.0
        %419 = vmatprep.subr.mxu0 0.0
        %420 = vmatpush1.msra.mxu0 0.0
        %421 = vmatprep.subr.mxu0 0.0
        %422 = vmatpush1.msra.mxu0 0.0
        %423 = vmatprep.subr.mxu0 0.0
        %424 = vmatpush1.msra.mxu0 0.0
        %425 = vmatprep.subr.mxu0 0.0
        %426 = vmatpush1.msra.mxu0 0.0
        %427 = vmatprep.subr.mxu0 0.0
        %428 = vmatpush1.msra.mxu0 0.0
        %429 = vmatprep.subr.mxu0 0.0
        %430 = vmatpush1.msra.mxu0 0.0
        %431 = vmatprep.subr.mxu0 0.0
        %432 = vmatpush1.msra.mxu0 0.0
        %433 = vmatprep.subr.mxu0 0.0
        %434 = vmatpush1.msra.mxu0 0.0
        %435 = vmatprep.subr.mxu0 0.0
        %436 = vmatpush1.msra.mxu0 0.0
        %437 = vmatprep.subr.mxu0 0.0
        %438 = vmatpush1.msra.mxu0 0.0
        %439 = vmatprep.mubr.f32.mxu0 0.0
        %440 = vmatmul.mubr.f32.gmra.mrb[0].mxu0 %v343
        %v441 = vpop.f32.mrb[0].mxu0
        %v442 = vadd.f32 0.0, %v441
        %v443 = vpop.f32.mrb[0].mxu0
        %444 = vmatprep.mubr.f32.mxu0 0.0
        %445 = vmatmul.mubr.f32.gmra.mrb[0].mxu0 %v344
        %v446 = vpop.f32.mrb[0].mxu0
        %v447 = vadd.f32 0.0, %v446
        %v448 = vpop.f32.mrb[0].mxu0
        %449 = vmatprep.mubr.f32.mxu0 0.0
        %450 = vmatmul.mubr.f32.gmra.mrb[0].mxu0 %v345
        %v451 = vpop.f32.mrb[0].mxu0
        %v452 = vadd.f32 0.0, %v451
        %v453 = vpop.f32.mrb[0].mxu0
        %454 = vmatprep.mubr.f32.mxu0 0.0
        %455 = vmatmul.mubr.f32.gmra.mrb[0].mxu0 %v346
        %v456 = vpop.f32.mrb[0].mxu0
        %v457 = vadd.f32 0.0, %v456
        %v458 = vpop.f32.mrb[0].mxu0
        %459 = vmatprep.mubr.f32.mxu0 0.0
        %460 = vmatmul.mubr.f32.gmra.mrb[0].mxu0 %v347
        %v461 = vpop.f32.mrb[0].mxu0
        %v462 = vadd.f32 0.0, %v461
        %v463 = vpop.f32.mrb[0].mxu0
        %464 = vmatprep.mubr.f32.mxu0 0.0
        %465 = vmatmul.mubr.f32.gmra.mrb[0].mxu0 %v348
        %v466 = vpop.f32.mrb[0].mxu0
        %v467 = vadd.f32 0.0, %v466
        %v468 = vpop.f32.mrb[0].mxu0
        %469 = vmatprep.mubr.f32.mxu0 0.0
        %470 = vmatmul.mubr.f32.gmra.mrb[0].mxu0 %v349
        %v471 = vpop.f32.mrb[0].mxu0
        %v472 = vadd.f32 0.0, %v471
        %v473 = vpop.f32.mrb[0].mxu0
        %474 = vmatprep.mubr.f32.mxu0 0.0
        %475 = vmatmul.mubr.f32.gmra.mrb[0].mxu0 %v350
        %v476 = vpop.f32.mrb[0].mxu0
        %v477 = vadd.f32 0.0, %v476
        %v478 = vpop.f32.mrb[0].mxu0
        %479 = vmatprep.mubr.f32.mxu0 0.0
        %480 = vmatmul.mubr.f32.gmra.mrb[0].mxu0 %v351
        %v481 = vpop.f32.mrb[0].mxu0
        %v482 = vadd.f32 0.0, %v481
        %v483 = vpop.f32.mrb[0].mxu0
        %484 = vmatprep.mubr.f32.mxu0 0.0
        %485 = vmatmul.mubr.f32.gmra.mrb[0].mxu0 %v352
        %v486 = vpop.f32.mrb[0].mxu0
        %v487 = vadd.f32 0.0, %v486
        %v488 = vpop.f32.mrb[0].mxu0
        %489 = vmatprep.mubr.f32.mxu0 0.0
        %490 = vmatmul.mubr.f32.gmra.mrb[0].mxu0 %v353
        %v491 = vpop.f32.mrb[0].mxu0
        %v492 = vadd.f32 0.0, %v491
        %v493 = vpop.f32.mrb[0].mxu0
        %494 = vmatprep.mubr.f32.mxu0 0.0
        %495 = vmatmul.mubr.f32.gmra.mrb[0].mxu0 %v354
        %v496 = vpop.f32.mrb[0].mxu0
        %v497 = vadd.f32 0.0, %v496
        %v498 = vpop.f32.mrb[0].mxu0
        %499 = vmatprep.mubr.f32.mxu0 0.0
        %500 = vmatmul.mubr.f32.gmra.mrb[0].mxu0 %v355
        %v501 = vpop.f32.mrb[0].mxu0
        %v502 = vadd.f32 0.0, %v501
        %v503 = vpop.f32.mrb[0].mxu0
        %504 = vmatprep.mubr.f32.mxu0 0.0
        %505 = vmatmul.mubr.f32.gmra.mrb[0].mxu0 %v356
        %v506 = vpop.f32.mrb[0].mxu0
        %v507 = vadd.f32 0.0, %v506
        %v508 = vpop.f32.mrb[0].mxu0
        %509 = vmatprep.mubr.f32.mxu0 0.0
        %510 = vmatmul.mubr.f32.gmra.mrb[0].mxu0 %v357
        %v511 = vpop.f32.mrb[0].mxu0
        %v512 = vadd.f32 0.0, %v511
        %v513 = vpop.f32.mrb[0].mxu0
        %514 = vmatprep.mubr.f32.mxu0 0.0
        %515 = vmatmul.mubr.f32.gmra.mrb[0].mxu0 %v358
        %v516 = vpop.f32.mrb[0].mxu0
        %v517 = vadd.f32 0.0, %v516
        %v518 = vpop.f32.mrb[0].mxu0
        %519 = vdwg.mxu0
        %v520 = vadd.f32 %v311, %v442
        %v521 = vadd.f32 %v312, %v447
        %v522 = vadd.f32 %v313, %v452
        %v523 = vadd.f32 %v314, %v457
        %v524 = vadd.f32 %v315, %v462
        %v525 = vadd.f32 %v316, %v467
        %v526 = vadd.f32 %v317, %v472
        %v527 = vadd.f32 %v318, %v477
        %v528 = vadd.f32 %v319, %v482
        %v529 = vadd.f32 %v320, %v487
        %v530 = vadd.f32 %v321, %v492
        %v531 = vadd.f32 %v322, %v497
        %v532 = vadd.f32 %v323, %v502
        %v533 = vadd.f32 %v324, %v507
        %v534 = vadd.f32 %v325, %v512
        %v535 = vadd.f32 %v326, %v517
        %536 = vst [vmem:[#allocation2] sm:$0xff] %v520
        %537 = vst [vmem:[#allocation2 + $0x8] sm:$0xff] %v521
        %538 = vst [vmem:[#allocation2 + $0x10] sm:$0xff] %v522
        %539 = vst [vmem:[#allocation2 + $0x18] sm:$0xff] %v523
        %540 = vst [vmem:[#allocation2 + $0x20] sm:$0xff] %v524
        %541 = vst [vmem:[#allocation2 + $0x28] sm:$0xff] %v525
        %542 = vst [vmem:[#allocation2 + $0x30] sm:$0xff] %v526
        %543 = vst [vmem:[#allocation2 + $0x38] sm:$0xff] %v527
        %544 = vst [vmem:[#allocation2 + $0x40] sm:$0xff] %v528
        %545 = vst [vmem:[#allocation2 + $0x48] sm:$0xff] %v529
        %546 = vst [vmem:[#allocation2 + $0x50] sm:$0xff] %v530
        %547 = vst [vmem:[#allocation2 + $0x58] sm:$0xff] %v531
        %548 = vst [vmem:[#allocation2 + $0x60] sm:$0xff] %v532
        %549 = vst [vmem:[#allocation2 + $0x68] sm:$0xff] %v533
        %550 = vst [vmem:[#allocation2 + $0x70] sm:$0xff] %v534
        %551 = vst [vmem:[#allocation2 + $0x78] sm:$0xff] %v535
        // Predicated region
        $region41: #{tpu_custom_call.1} parent=31 // pred_check
          %p552 = pneg %p291
        $region42: #{tpu_custom_call.1} parent=31 // pred_check_branch
          %554 = sbr.rel (%p552) target = $region44
        $region43: #{tpu_custom_call.1} parent=31 // pred_region
          %v555 = vld [vmem:[%s277] sm:$0xff]
          %v556 = vld [vmem:[%s277 + $0x8] sm:$0xff]
          %v557 = vld [vmem:[%s277 + $0x10] sm:$0xff]
          %v558 = vld [vmem:[%s277 + $0x18] sm:$0xff]
          %v559 = vld [vmem:[%s277 + $0x20] sm:$0xff]
          %v560 = vld [vmem:[%s277 + $0x28] sm:$0xff]
          %v561 = vld [vmem:[%s277 + $0x30] sm:$0xff]
          %v562 = vld [vmem:[%s277 + $0x38] sm:$0xff]
          %v563 = vld [vmem:[%s277 + $0x40] sm:$0xff]
          %v564 = vld [vmem:[%s277 + $0x48] sm:$0xff]
          %v565 = vld [vmem:[%s277 + $0x50] sm:$0xff]
          %v566 = vld [vmem:[%s277 + $0x58] sm:$0xff]
          %v567 = vld [vmem:[%s277 + $0x60] sm:$0xff]
          %v568 = vld [vmem:[%s277 + $0x68] sm:$0xff]
          %v569 = vld [vmem:[%s277 + $0x70] sm:$0xff]
          %v570 = vld [vmem:[%s277 + $0x78] sm:$0xff]
          %v571 = vld [vmem:[#allocation2] sm:$0xff]
          %v572 = vld [vmem:[#allocation2 + $0x8] sm:$0xff]
          %v573 = vld [vmem:[#allocation2 + $0x10] sm:$0xff]
          %v574 = vld [vmem:[#allocation2 + $0x18] sm:$0xff]
          %v575 = vld [vmem:[#allocation2 + $0x20] sm:$0xff]
          %v576 = vld [vmem:[#allocation2 + $0x28] sm:$0xff]
          %v577 = vld [vmem:[#allocation2 + $0x30] sm:$0xff]
          %v578 = vld [vmem:[#allocation2 + $0x38] sm:$0xff]
          %v579 = vld [vmem:[#allocation2 + $0x40] sm:$0xff]
          %v580 = vld [vmem:[#allocation2 + $0x48] sm:$0xff]
          %v581 = vld [vmem:[#allocation2 + $0x50] sm:$0xff]
          %v582 = vld [vmem:[#allocation2 + $0x58] sm:$0xff]
          %v583 = vld [vmem:[#allocation2 + $0x60] sm:$0xff]
          %v584 = vld [vmem:[#allocation2 + $0x68] sm:$0xff]
          %v585 = vld [vmem:[#allocation2 + $0x70] sm:$0xff]
          %v586 = vld [vmem:[#allocation2 + $0x78] sm:$0xff]
          %588 = vset.pattern.permute.xlu0 0
          %589 = vperm.xlu0 %588, %v555
          %v590 = vpop.permute.xlu0 %589
          %593 = vset.pattern.permute.xlu0 0
          %594 = vperm.xlu0 %593, %v556
          %v595 = vpop.permute.xlu0 %594
          %598 = vset.pattern.permute.xlu0 0
          %599 = vperm.xlu0 %598, %v557
          %v600 = vpop.permute.xlu0 %599
          %603 = vset.pattern.permute.xlu0 0
          %604 = vperm.xlu0 %603, %v558
          %v605 = vpop.permute.xlu0 %604
          %608 = vset.pattern.permute.xlu0 0
          %609 = vperm.xlu0 %608, %v559
          %v610 = vpop.permute.xlu0 %609
          %613 = vset.pattern.permute.xlu0 0
          %614 = vperm.xlu0 %613, %v560
          %v615 = vpop.permute.xlu0 %614
          %618 = vset.pattern.permute.xlu0 0
          %619 = vperm.xlu0 %618, %v561
          %v620 = vpop.permute.xlu0 %619
          %623 = vset.pattern.permute.xlu0 0
          %624 = vperm.xlu0 %623, %v562
          %v625 = vpop.permute.xlu0 %624
          %628 = vset.pattern.permute.xlu0 0
          %629 = vperm.xlu0 %628, %v563
          %v630 = vpop.permute.xlu0 %629
          %633 = vset.pattern.permute.xlu0 0
          %634 = vperm.xlu0 %633, %v564
          %v635 = vpop.permute.xlu0 %634
          %638 = vset.pattern.permute.xlu0 0
          %639 = vperm.xlu0 %638, %v565
          %v640 = vpop.permute.xlu0 %639
          %643 = vset.pattern.permute.xlu0 0
          %644 = vperm.xlu0 %643, %v566
          %v645 = vpop.permute.xlu0 %644
          %648 = vset.pattern.permute.xlu0 0
          %649 = vperm.xlu0 %648, %v567
          %v650 = vpop.permute.xlu0 %649
          %653 = vset.pattern.permute.xlu0 0
          %654 = vperm.xlu0 %653, %v568
          %v655 = vpop.permute.xlu0 %654
          %658 = vset.pattern.permute.xlu0 0
          %659 = vperm.xlu0 %658, %v569
          %v660 = vpop.permute.xlu0 %659
          %663 = vset.pattern.permute.xlu0 0
          %664 = vperm.xlu0 %663, %v570
          %v665 = vpop.permute.xlu0 %664
          %v667 = vmul.f32 %v590, %v571
          %v668 = vmul.f32 %v595, %v572
          %v669 = vmul.f32 %v600, %v573
          %v670 = vmul.f32 %v605, %v574
          %v671 = vmul.f32 %v610, %v575
          %v672 = vmul.f32 %v615, %v576
          %v673 = vmul.f32 %v620, %v577
          %v674 = vmul.f32 %v625, %v578
          %v675 = vmul.f32 %v630, %v579
          %v676 = vmul.f32 %v635, %v580
          %v677 = vmul.f32 %v640, %v581
          %v678 = vmul.f32 %v645, %v582
          %v679 = vmul.f32 %v650, %v583
          %v680 = vmul.f32 %v655, %v584
          %v681 = vmul.f32 %v660, %v585
          %v682 = vmul.f32 %v665, %v586
          %683 = vst [vmem:[%s268] sm:$0xff] %v667
          %684 = vst [vmem:[%s268 + $0x8] sm:$0xff] %v668
          %685 = vst [vmem:[%s268 + $0x10] sm:$0xff] %v669
          %686 = vst [vmem:[%s268 + $0x18] sm:$0xff] %v670
          %687 = vst [vmem:[%s268 + $0x20] sm:$0xff] %v671
          %688 = vst [vmem:[%s268 + $0x28] sm:$0xff] %v672
          %689 = vst [vmem:[%s268 + $0x30] sm:$0xff] %v673
          %690 = vst [vmem:[%s268 + $0x38] sm:$0xff] %v674
          %691 = vst [vmem:[%s268 + $0x40] sm:$0xff] %v675
          %692 = vst [vmem:[%s268 + $0x48] sm:$0xff] %v676
          %693 = vst [vmem:[%s268 + $0x50] sm:$0xff] %v677
          %694 = vst [vmem:[%s268 + $0x58] sm:$0xff] %v678
          %695 = vst [vmem:[%s268 + $0x60] sm:$0xff] %v679
          %696 = vst [vmem:[%s268 + $0x68] sm:$0xff] %v680
          %697 = vst [vmem:[%s268 + $0x70] sm:$0xff] %v681
          %698 = vst [vmem:[%s268 + $0x78] sm:$0xff] %v682
        $region44: #{tpu_custom_call.1} parent=31 // pred_fallthru
          _
        %s699 = sand.u32 %s135, 1
        %s700 = scalar_lea.sflag [#allocation5], %s699
        %s701 = sand.u32 %s135, 1
        %s702 = smul.addr %s701, 128
        %s703 = scalar_lea.vmem [#allocation6], %s702
        // Predicated region
        $region45: #{tpu_custom_call.1} parent=31 // pred_check
          %p704 = pneg %p145
        $region46: #{tpu_custom_call.1} parent=31 // pred_check_branch
          %706 = sbr.rel (%p704) target = $region48
        $region47: #{tpu_custom_call.1} parent=31 // pred_region
          %s707 = smul.u32 16, %s26
          %s709 = ssub.s32 2048, 2048
          %710 = vsyncadd %s700, %s709
          %s711 = smul.addr %s25, 16
          %s712 = sadd.s32 %s707, %s711
          %s713 = smul.addr %s712, 128
          %s714 = scalar_lea.hbm %s3, %s713
          %s715 = sshll.u32 %s703, 4
          %s716 = int_to_ptr.vmem [resolvable:$true] %s715
          %721 = dma.vmem_to_hbm [thread:$0]  %s716, 2048, %s714, %s700, 128, 128, 8
        $region48: #{tpu_custom_call.1} parent=31 // pred_fallthru
          _
      $region32: #{tpu_custom_call.1} parent=5 // pred_fallthru
        _
      %p722 = scmp.le.s32.totalorder 2, %s15
      // Predicated region
      $region49: #{tpu_custom_call.1} parent=5 // pred_check
        %p723 = pneg %p722
      $region50: #{tpu_custom_call.1} parent=5 // pred_check_branch
        %725 = sbr.rel (%p723) target = $region52
      $region51: #{tpu_custom_call.1} parent=5 // pred_region
        %s726 = ssub.s32 %s15, 2
        // Predicated region
        $region53: #{tpu_custom_call.1} parent=51 // pred_check
          %p727 = pneg %p151
        $region54: #{tpu_custom_call.1} parent=51 // pred_check_branch
          %729 = sbr.rel (%p727) target = $region56
        $region55: #{tpu_custom_call.1} parent=51 // pred_region
          %s730 = sand.u32 %s136, 1
          %s731 = scalar_lea.sflag [#allocation5], %s730
          %s732 = sand.u32 %s136, 1
          %s733 = smul.addr %s732, 128
          %s734 = scalar_lea.vmem [#allocation6], %s733
          %735 = dma.done %s731, 2048
        $region56: #{tpu_custom_call.1} parent=51 // pred_fallthru
          _
      $region52: #{tpu_custom_call.1} parent=5 // pred_fallthru
        _
    $region6: #{tpu_custom_call.1} parent=1 // loop_footer
      %s19 = sadd.s32 1, %s15
    $region7: #{tpu_custom_call.1} parent=1 // loop_footer_branch
      %14 = sbr.rel target = $region3
    $region8: #{tpu_custom_call.1} parent=1 // loop_exit
      _
    %736 = vsyncpa [#allocation4], 1
    %s737 = scalar_lea.sflag [#allocation4], 1
    %738 = vsyncpa %s737, 1
    %739 = vsyncpa [#allocation5], 1
    %s740 = scalar_lea.sflag [#allocation5], 1
    %741 = vsyncpa %s740, 1

</llo_original>
